<compile_context>
chip_gen: v7x
topology: tpu7x:2x2x1
jax: 0.10.0
libtpu: 0.0.40
codegen_flags: <defaults>
</compile_context>

<pallas_src>
import functools

import jax
import jax.numpy as jnp
from jax.experimental import pallas as pl
from jax.experimental.pallas import tpu as pltpu


def _round_up(x, m):
    return ((x + m - 1) // m) * m


def _cdiv(a, b):
    return -(-a // b)


def _a_model_kernel(x1_ref, a_ref, x2t_ref, o_ref, t_ref):
    # Grid = (i over B1 tiles, j over B2 tiles); j varies fastest and MUST stay
    # "arbitrary": the t cache is filled at j == 0 and reused for all later j.
    j = pl.program_id(1)

    # First matmul only once per B1 tile; cached in VMEM (operand dtype) for all j.
    @pl.when(j == 0)
    def _():
        t_ref[...] = jnp.dot(
            x1_ref[...], a_ref[...], preferred_element_type=jnp.float32
        ).astype(t_ref.dtype)

    # Second matmul: t (tm, d_out) @ x2t (d_out, tn).  x2 was transposed in the
    # wrapper, so the MXU sees a native (M,K)x(K,N) layout, no in-kernel transpose.
    o_ref[...] = jnp.dot(
        t_ref[...], x2t_ref[...], preferred_element_type=jnp.float32
    ).astype(o_ref.dtype)


@functools.partial(jax.jit, static_argnames=("tm", "tn", "operand_dtype"))
def a_model_forward(x1, x2, A, *, tm=512, tn=512, operand_dtype=jnp.bfloat16):
    B1, d_in = x1.shape
    B2, d_out = x2.shape
    assert A.shape == (d_in, d_out)

    op_bytes = jnp.dtype(operand_dtype).itemsize

    # bf16 operands for the MXU (f32 accumulation); pass operand_dtype=jnp.float32
    # if bit-closer-to-fp32 results are required.
    x1c = x1.astype(operand_dtype)
    ac = A.astype(operand_dtype)
    x2t = x2.astype(operand_dtype).T  # (d_out, B2): contraction dim on sublanes.

    # ---------- single-block fast path (no padding, no slicing, grid=(1,1)) ----------
    small_bytes = (
        2 * (B1 * d_in + d_in * d_out + d_out * B2) * op_bytes
        + 2 * B1 * B2 * 4
        + B1 * d_out * op_bytes
    )
    single_block = B1 <= 256 and B2 <= 256 and small_bytes <= 12 * 2**20

    if single_block:
        d_in_p, d_out_p = d_in, d_out
        tm_, tn_ = B1, B2
        x1_p, a_p, x2t_p = x1c, ac, x2t
        padded = False
    else:
        # ---------- tiled path: pad to (8,128)-aligned tiles ----------
        d_in_p = _round_up(d_in, 128)
        d_out_p = _round_up(d_out, 128)
        tm_ = min(tm, _round_up(B1, 8))
        tn_ = min(tn, _round_up(B2, 128))

        # Keep >= 2 B1-tiles when B1 is large enough, so the "parallel" i axis can
        # actually split across v7x's two TensorCores.
        if B1 > 256 and _cdiv(B1, tm_) < 2:
            tm_ = _round_up(_cdiv(B1, 2), 8)

        # VMEM budget check (double-buffered inputs/outputs + t scratch); shrink tiles
        # if needed.  Budget is conservative for v7x's 64 MiB physical VMEM.
        def _vmem_est(tm__, tn__):
            return (
                2 * tm__ * d_in_p * op_bytes          # x1 tile (double buffered)
                + 2 * d_in_p * d_out_p * op_bytes      # full A (double buffered)
                + 2 * d_out_p * tn__ * op_bytes        # x2t tile (double buffered)
                + 2 * tm__ * tn__ * 4                  # out tile f32 (double buffered)
                + tm__ * d_out_p * op_bytes            # cached t scratch
            )

        budget = 40 * 2**20
        while _vmem_est(tm_, tn_) > budget and tn_ > 128:
            tn_ = max(128, _round_up(tn_ // 2, 128))
        while _vmem_est(tm_, tn_) > budget and tm_ > 8:
            tm_ = max(8, _round_up(tm_ // 2, 8))
        # TODO(synk): if A alone (2*d_in_p*d_out_p) exceeds the budget, add a k grid
        # axis over d_in/d_out instead of keeping A fully resident in VMEM.

        B1_p = _round_up(B1, tm_)
        B2_p = _round_up(B2, tn_)
        x1_p = jnp.pad(x1c, ((0, B1_p - B1), (0, d_in_p - d_in)))
        a_p = jnp.pad(ac, ((0, d_in_p - d_in), (0, d_out_p - d_out)))
        x2t_p = jnp.pad(x2t, ((0, d_out_p - d_out), (0, B2_p - B2)))
        padded = True

    grid = (x1_p.shape[0] // tm_, x2t_p.shape[1] // tn_)

    vmem_needed = (
        2 * tm_ * d_in_p * op_bytes
        + 2 * d_in_p * d_out_p * op_bytes
        + 2 * d_out_p * tn_ * op_bytes
        + 2 * tm_ * tn_ * 4
        + tm_ * d_out_p * op_bytes
    )
    vmem_limit = int(min(64 * 2**20, max(32 * 2**20, 1.25 * vmem_needed)))

    out_p = pl.pallas_call(
        _a_model_kernel,
        out_shape=jax.ShapeDtypeStruct((grid[0] * tm_, grid[1] * tn_), jnp.float32),
        grid_spec=pltpu.PrefetchScalarGridSpec(
            num_scalar_prefetch=0,
            grid=grid,
            in_specs=[
                pl.BlockSpec((tm_, d_in_p), lambda i, j: (i, 0)),       # x1 tile
                pl.BlockSpec((d_in_p, d_out_p), lambda i, j: (0, 0)),   # full A
                pl.BlockSpec((d_out_p, tn_), lambda i, j: (0, j)),      # x2.T tile
            ],
            out_specs=pl.BlockSpec((tm_, tn_), lambda i, j: (i, j)),
            scratch_shapes=[pltpu.VMEM((tm_, d_out_p), operand_dtype)],  # cached t
        ),
        compiler_params=pltpu.CompilerParams(
            # i (B1 tiles) is independent -> megacore-shard on v7x;
            # j must stay "arbitrary" because the t cache is filled at j == 0.
            dimension_semantics=("parallel", "arbitrary"),
            vmem_limit_bytes=vmem_limit,
        ),
    )(x1_p, a_p, x2t_p)

    if padded:
        out_p = out_p[:B1, :B2]
    return out_p


if __name__ == "__main__":
    key = jax.random.PRNGKey(0)
    k1, k2, k3, k4 = jax.random.split(key, 4)

    # Case 1: toy shapes matching the module's typical use (A_model(32, 32), batch 8).
    # Exercises the single-block fast path (no padding, grid=(1,1)).
    d_in, d_out, B1, B2 = 32, 32, 8, 8
    x1 = jax.random.normal(k1, (B1, d_in), dtype=jnp.float32)
    x2 = jax.random.normal(k2, (B2, d_out), dtype=jnp.float32)
    A = jnp.full((d_in, d_out), 0.001, dtype=jnp.float32)  # nn.Parameter(torch.full(...))

    out = a_model_forward(x1, x2, A)
    jax.block_until_ready(out)
    ref = x1 @ A @ x2.T
    assert out.shape == (B1, B2)
    assert jnp.allclose(out, ref, atol=5e-3, rtol=2e-2), float(jnp.max(jnp.abs(out - ref)))

    # Case 2: non-aligned multi-tile shapes (explicit smaller tiles) to exercise the
    # (i, j) grid, zero padding, and the cached-t reuse across j.
    B1b, B2b, d_in_b, d_out_b = 512, 384, 72, 200
    x1b = jax.random.normal(k3, (B1b, d_in_b), dtype=jnp.float32)
    x2b = jax.random.normal(k4, (B2b, d_out_b), dtype=jnp.float32)
    Ab = jnp.full((d_in_b, d_out_b), 0.001, dtype=jnp.float32)

    outb = a_model_forward(x1b, x2b, Ab, tm=256, tn=256)
    jax.block_until_ready(outb)
    refb = x1b @ Ab @ x2b.T
    assert outb.shape == (B1b, B2b)
    assert jnp.allclose(outb, refb, atol=1e-2, rtol=2e-2), float(jnp.max(jnp.abs(outb - refb)))

    print("KERNEL_OK")
</pallas_src>

<mosaic_0001>
module attributes {stable_mosaic.version = 11 : i64} {
  func.func @_a_model_kernel(%arg0: i32, %arg1: i32, %arg2: memref<8x32xbf16, #tpu.memory_space<vmem>>, %arg3: memref<32x32xbf16, #tpu.memory_space<vmem>>, %arg4: memref<32x8xbf16, #tpu.memory_space<vmem>>, %arg5: memref<8x8xf32, #tpu.memory_space<vmem>>, %arg6: memref<8x32xbf16, #tpu.memory_space<vmem>>) attributes {dimension_semantics = [#tpu.dimension_semantics<parallel>, #tpu.dimension_semantics<arbitrary>], iteration_bounds = array<i64: 1, 1>, scalar_prefetch = 0 : i64, scratch_operands = 1 : i64, tpu.core_type = #tpu.core_type<tc>, window_params = [{transform_indices = @transform_0, window_bounds = array<i64: 8, 32>}, {pipeline_mode = #tpu.pipeline_mode<synchronous>, transform_indices = @transform_1, window_bounds = array<i64: 32, 32>}, {transform_indices = @transform_2, window_bounds = array<i64: 32, 8>}, {transform_indices = @transform_3, window_bounds = array<i64: 8, 8>}]} {
    %c0_i32 = arith.constant 0 : i32
    %0 = arith.cmpi eq, %arg1, %c0_i32 : i32
    %1 = arith.extui %0 : i1 to i32
    %c0_i32_0 = arith.constant 0 : i32
    %2 = arith.cmpi ne, %1, %c0_i32_0 : i32
    scf.if %2 {
      %c0_6 = arith.constant 0 : index
      %c0_7 = arith.constant 0 : index
      %7 = vector.load %arg2[%c0_6, %c0_7] : memref<8x32xbf16, #tpu.memory_space<vmem>>, vector<8x32xbf16>
      %c0_8 = arith.constant 0 : index
      %c0_9 = arith.constant 0 : index
      %8 = vector.load %arg3[%c0_8, %c0_9] : memref<32x32xbf16, #tpu.memory_space<vmem>>, vector<32x32xbf16>
      %cst_10 = arith.constant dense<0.000000e+00> : vector<8x32xf32>
      %9 = tpu.matmul %7, %8, %cst_10 {dimension_numbers = #tpu.dot_dimension_numbers<[1], [0], [0], [1], [0, 0, 1, 1], [], []>} : vector<8x32xbf16>, vector<32x32xbf16>, vector<8x32xf32> -> vector<8x32xf32>
      %10 = arith.truncf %9 : vector<8x32xf32> to vector<8x32xbf16>
      %c0_11 = arith.constant 0 : index
      %c0_12 = arith.constant 0 : index
      %11 = vector.load %arg6[%c0_11, %c0_12] : memref<8x32xbf16, #tpu.memory_space<vmem>>, vector<8x32xbf16>
      tpu.vector_store %arg6[%c0_11, %c0_12], %10 {strides = array<i32>} : memref<8x32xbf16, #tpu.memory_space<vmem>>, vector<8x32xbf16>,
    } else {
    }
    %c0 = arith.constant 0 : index
    %c0_1 = arith.constant 0 : index
    %3 = vector.load %arg6[%c0, %c0_1] : memref<8x32xbf16, #tpu.memory_space<vmem>>, vector<8x32xbf16>
    %c0_2 = arith.constant 0 : index
    %c0_3 = arith.constant 0 : index
    %4 = vector.load %arg4[%c0_2, %c0_3] : memref<32x8xbf16, #tpu.memory_space<vmem>>, vector<32x8xbf16>
    %cst = arith.constant dense<0.000000e+00> : vector<8x8xf32>
    %5 = tpu.matmul %3, %4, %cst {dimension_numbers = #tpu.dot_dimension_numbers<[1], [0], [0], [1], [0, 0, 1, 1], [], []>} : vector<8x32xbf16>, vector<32x8xbf16>, vector<8x8xf32> -> vector<8x8xf32>
    %c0_4 = arith.constant 0 : index
    %c0_5 = arith.constant 0 : index
    %6 = vector.load %arg5[%c0_4, %c0_5] : memref<8x8xf32, #tpu.memory_space<vmem>>, vector<8x8xf32>
    tpu.vector_store %arg5[%c0_4, %c0_5], %5 {strides = array<i32>} : memref<8x8xf32, #tpu.memory_space<vmem>>, vector<8x8xf32>,
    return
  }
  func.func @transform_0(%arg0: i32, %arg1: i32) -> (i32, i32) {
    %c0_i32 = arith.constant 0 : i32
    %c0_i32_0 = arith.constant 0 : i32
    return %arg0, %c0_i32 : i32, i32
  }
  func.func @transform_1(%arg0: i32, %arg1: i32) -> (i32, i32) {
    %c0_i32 = arith.constant 0 : i32
    %c0_i32_0 = arith.constant 0 : i32
    %c0_i32_1 = arith.constant 0 : i32
    return %c0_i32, %c0_i32_0 : i32, i32
  }
  func.func @transform_2(%arg0: i32, %arg1: i32) -> (i32, i32) {
    %c0_i32 = arith.constant 0 : i32
    %c0_i32_0 = arith.constant 0 : i32
    return %c0_i32, %arg1 : i32, i32
  }
  func.func @transform_3(%arg0: i32, %arg1: i32) -> (i32, i32) {
    %c0_i32 = arith.constant 0 : i32
    return %arg0, %arg1 : i32, i32
  }
}

</mosaic_0001>

<llo_original>
// kernel: a_model_forward.1
$region0: #{a_model_forward.1}
  #allocation0 [shape = 'u32[]', space=smem, size = 0x4, offset = 0x4, fixed_abs, tag = 'smem constant byte address 0x4 - core index']
  #allocation1 [shape = 'u32[144,128]{1,0:T(1,128)}', space=vmem, size = 0x12000, scoped, tag = 'internal scratch']
  #allocation2 [shape = 'bf16[8,32]{1,0:T(8,128)(2,1)}', space=vmem, size = 0x800, scoped, tag = 'scratch operand']
  %s0 = inlined_call_operand.vmem [shape: bf16[8,32], index: 0, kind: input, shape index: {}]
  %s1 = inlined_call_operand.vmem [shape: bf16[32,32], index: 1, kind: input, shape index: {}]
  %s2 = inlined_call_operand.vmem [shape: bf16[32,8], index: 2, kind: input, shape index: {}]
  %s3 = inlined_call_operand.hbm [shape: f32[8,8], index: 3, kind: output, shape index: {}]
  %s4 = sld [smem:[#allocation0]]
  $region26: #{a_model_forward.1} parent=0
    _
  %s6 = ssub.s32 1, %s4
  %s7 = scalar_select 0, %s6, %s4
  $region1: #{a_model_forward.1} parent=0
    #allocation3 [shape = 'u8[4096]{0}', space=vmem, size = 0x1000, scoped, tag = 'output window, operand 0, single buffered']
    #allocation4 [shape = 's32[1]{0}', space=sflag, size = 0x4, scoped, tag = 'scoped memory for a_model_forward.1']
    %8 = vsyncpa [#allocation4], 0
    // Predicated region
    $region2: #{a_model_forward.1} parent=1 // pred_check
      _
    $region3: #{a_model_forward.1} parent=1 // pred_check_branch
      %10 = sbr.rel (0) target = $region5
    $region4: #{a_model_forward.1} parent=1 // pred_region
      _
    $region5: #{a_model_forward.1} parent=1 // pred_fallthru
      _
    // Predicated region
    $region6: #{a_model_forward.1} parent=1 // pred_check
      _
    $region7: #{a_model_forward.1} parent=1 // pred_check_branch
      %12 = sbr.rel (0) target = $region9
    $region8: #{a_model_forward.1} parent=1 // pred_region
      _
    $region9: #{a_model_forward.1} parent=1 // pred_fallthru
      _
    // Predicated region
    $region10: #{a_model_forward.1} parent=1 // pred_check
      _
    $region11: #{a_model_forward.1} parent=1 // pred_check_branch
      %14 = sbr.rel (0) target = $region13
    $region12: #{a_model_forward.1} parent=1 // pred_region
      _
    $region13: #{a_model_forward.1} parent=1 // pred_fallthru
      _
    %p16 = scmp.eq.s32.totalorder 0, 0
    // Predicated region
    $region14: #{a_model_forward.1} parent=1 // pred_check
      %p17 = pneg %p16
    $region15: #{a_model_forward.1} parent=1 // pred_check_branch
      %19 = sbr.rel (%p17) target = $region17
    $region16: #{a_model_forward.1} parent=1 // pred_region
      %v20 = vld [vmem:[%s0] sm:$0xf]
      %v21 = vld [vmem:[%s1] sm:$0xf]
      %v22 = vld [vmem:[%s1 + $0x4] sm:$0xf]
      %v23 = vld [vmem:[%s1 + $0x8] sm:$0xf]
      %v24 = vld [vmem:[%s1 + $0xc] sm:$0xf]
      %v29 = vunpack.c.l.b16 %v21
      %v30 = vunpack.c.l.b16 %v22
      %v31 = vunpack.c.l.b16 %v23
      %v32 = vunpack.c.l.b16 %v24
      %v33 = vpack.c.b16 %v30, %v29
      %v34 = vpack.c.b16 %v32, %v31
      %vm37 = vcmask 261120
      %v39 = vsel %vm37, %v20, 0
      %41 = vmatprep.subr.bf16.mxu0 0
      %42 = vmatpush1.bf16.msra.mxu0 %v33
      %43 = vmatprep.subr.bf16.mxu0 0
      %44 = vmatpush1.bf16.msra.mxu0 %v34
      %45 = vmatprep.subr.bf16.mxu0 0
      %46 = vmatpush1.bf16.msra.mxu0 0
      %47 = vmatprep.subr.bf16.mxu0 0
      %48 = vmatpush1.bf16.msra.mxu0 0
      %49 = vmatprep.subr.bf16.mxu0 0
      %50 = vmatpush1.bf16.msra.mxu0 0
      %51 = vmatprep.subr.bf16.mxu0 0
      %52 = vmatpush1.bf16.msra.mxu0 0
      %53 = vmatprep.subr.bf16.mxu0 0
      %54 = vmatpush1.bf16.msra.mxu0 0
      %55 = vmatprep.subr.bf16.mxu0 0
      %56 = vmatpush1.bf16.msra.mxu0 0
      %57 = vmatprep.subr.bf16.mxu0 0
      %58 = vmatpush1.bf16.msra.mxu0 0
      %59 = vmatprep.subr.bf16.mxu0 0
      %60 = vmatpush1.bf16.msra.mxu0 0
      %61 = vmatprep.subr.bf16.mxu0 0
      %62 = vmatpush1.bf16.msra.mxu0 0
      %63 = vmatprep.subr.bf16.mxu0 0
      %64 = vmatpush1.bf16.msra.mxu0 0
      %65 = vmatprep.subr.bf16.mxu0 0
      %66 = vmatpush1.bf16.msra.mxu0 0
      %67 = vmatprep.subr.bf16.mxu0 0
      %68 = vmatpush1.bf16.msra.mxu0 0
      %69 = vmatprep.subr.bf16.mxu0 0
      %70 = vmatpush1.bf16.msra.mxu0 0
      %71 = vmatprep.subr.bf16.mxu0 0
      %72 = vmatpush1.bf16.msra.mxu0 0
      %73 = vmatprep.mubr.bf16.mxu0 0
      %74 = vmatmul.mubr.bf16.gmra.mrb[0].mxu0 %v39
      %v75 = vpop.f32.mrb[0].mxu0
      %v76 = vadd.f32 0.0, %v75
      %v77 = vpop.f32.mrb[0].mxu0
      %v78 = vpop.f32.mrb[0].mxu0
      %v79 = vpop.f32.mrb[0].mxu0
      %80 = vdwg.mxu0
      %v81 = vpack.c.bf16 %v76, %v76
      %vm82 = vcmask 257024
      %83 = vst.msk [vmem:[#allocation2] sm:$0xf] %vm82, %v81
    $region17: #{a_model_forward.1} parent=1 // pred_fallthru
      _
    %v84 = vld [vmem:[#allocation2] sm:$0xf]
    %v85 = vld [vmem:[%s2] sm:$0xf]
    %v86 = vld [vmem:[%s2 + $0x4] sm:$0xf]
    %v87 = vld [vmem:[%s2 + $0x8] sm:$0xf]
    %v88 = vld [vmem:[%s2 + $0xc] sm:$0xf]
    %v93 = vunpack.c.l.b16 %v85
    %v94 = vunpack.c.l.b16 %v86
    %v95 = vunpack.c.l.b16 %v87
    %v96 = vunpack.c.l.b16 %v88
    %v97 = vpack.c.b16 %v94, %v93
    %v98 = vpack.c.b16 %v96, %v95
    %vm101 = vcmask 261120
    %v103 = vsel %vm101, %v84, 0
    %105 = vmatprep.subr.bf16.mxu0 0
    %106 = vmatpush1.bf16.msra.mxu0 %v97
    %107 = vmatprep.subr.bf16.mxu0 0
    %108 = vmatpush1.bf16.msra.mxu0 %v98
    %109 = vmatprep.subr.bf16.mxu0 0
    %110 = vmatpush1.bf16.msra.mxu0 0
    %111 = vmatprep.subr.bf16.mxu0 0
    %112 = vmatpush1.bf16.msra.mxu0 0
    %113 = vmatprep.subr.bf16.mxu0 0
    %114 = vmatpush1.bf16.msra.mxu0 0
    %115 = vmatprep.subr.bf16.mxu0 0
    %116 = vmatpush1.bf16.msra.mxu0 0
    %117 = vmatprep.subr.bf16.mxu0 0
    %118 = vmatpush1.bf16.msra.mxu0 0
    %119 = vmatprep.subr.bf16.mxu0 0
    %120 = vmatpush1.bf16.msra.mxu0 0
    %121 = vmatprep.subr.bf16.mxu0 0
    %122 = vmatpush1.bf16.msra.mxu0 0
    %123 = vmatprep.subr.bf16.mxu0 0
    %124 = vmatpush1.bf16.msra.mxu0 0
    %125 = vmatprep.subr.bf16.mxu0 0
    %126 = vmatpush1.bf16.msra.mxu0 0
    %127 = vmatprep.subr.bf16.mxu0 0
    %128 = vmatpush1.bf16.msra.mxu0 0
    %129 = vmatprep.subr.bf16.mxu0 0
    %130 = vmatpush1.bf16.msra.mxu0 0
    %131 = vmatprep.subr.bf16.mxu0 0
    %132 = vmatpush1.bf16.msra.mxu0 0
    %133 = vmatprep.subr.bf16.mxu0 0
    %134 = vmatpush1.bf16.msra.mxu0 0
    %135 = vmatprep.subr.bf16.mxu0 0
    %136 = vmatpush1.bf16.msra.mxu0 0
    %137 = vmatprep.mubr.bf16.mxu0 0
    %138 = vmatmul.mubr.bf16.gmra.mrb[0].mxu0 %v103
    %v139 = vpop.f32.mrb[0].mxu0
    %v140 = vadd.f32 0.0, %v139
    %v141 = vpop.f32.mrb[0].mxu0
    %v142 = vpop.f32.mrb[0].mxu0
    %v143 = vpop.f32.mrb[0].mxu0
    %144 = vdwg.mxu0
    %vm145 = vcmask 64512
    %146 = vst.msk [vmem:[#allocation3] sm:$0xff] %vm145, %v140
    // Predicated region
    $region18: #{a_model_forward.1} parent=1 // pred_check
      _
    $region19: #{a_model_forward.1} parent=1 // pred_check_branch
      %148 = sbr.rel (0) target = $region21
    $region20: #{a_model_forward.1} parent=1 // pred_region
      %s150 = ssub.s32 128, 128
      %151 = vsyncadd [#allocation4], %s150
      %s153 = sshll.u32 [#allocation3], 4
      %s154 = int_to_ptr.vmem [resolvable:$true] %s153
      %156 = dma.vmem_to_hbm [thread:$0]  %s154, 128, %s3, [#allocation4]
    $region21: #{a_model_forward.1} parent=1 // pred_fallthru
      _
    // Predicated region
    $region22: #{a_model_forward.1} parent=1 // pred_check
      _
    $region23: #{a_model_forward.1} parent=1 // pred_check_branch
      %158 = sbr.rel (0) target = $region25
    $region24: #{a_model_forward.1} parent=1 // pred_region
      %159 = dma.done [#allocation4], 128
    $region25: #{a_model_forward.1} parent=1 // pred_fallthru
      _
    %160 = vsyncpa [#allocation4], 1

</llo_original>
